<compile_context>
chip_gen: v7x
topology: tpu7x:2x2x1
jax: 0.10.0
libtpu: 0.0.40
codegen_flags: <defaults>
</compile_context>

<pallas_src>
import jax
import jax.numpy as jnp
from jax.experimental import pallas as pl
from jax.experimental.pallas import tpu as pltpu


# ---------------------------------------------------------------------------
# Kernels
# ---------------------------------------------------------------------------
def _gcn_kernel_project(a_ref, x_ref, di_ref, w_ref, b_ref, o_ref, acc_ref):
    # a_ref:   (tm, tk)       int8  adjacency tile A[i_blk, k_blk] (with self loops)
    # x_ref:   (tk, F)        bf16  features pre-scaled by source-side deg^{-1/2}
    # di_ref:  (tm, 1)        f32   dest-side deg^{-1/2}
    # w_ref:   (F, Fo)        bf16  padded W^T
    # b_ref:   (1, Fo)        f32   bias
    # o_ref:   (tm, Fo)             output
    # acc_ref: (tm, F)        f32   scratch accumulator (resident across k)
    k = pl.program_id(1)

    @pl.when(k == 0)
    def _init():
        acc_ref[...] = jnp.zeros_like(acc_ref)

    # int8 -> bf16 upcast (VPU work, hidden under the A DMA); bf16 MXU, f32 acc.
    acc_ref[...] += jnp.dot(a_ref[...].astype(jnp.bfloat16), x_ref[...],
                            preferred_element_type=jnp.float32)

    @pl.when(k == pl.num_programs(1) - 1)
    def _finalize():
        agg = acc_ref[...] * di_ref[...]              # dest-side deg^{-1/2}
        out = jnp.dot(agg.astype(jnp.bfloat16), w_ref[...],
                      preferred_element_type=jnp.float32)
        o_ref[...] = (out + b_ref[...]).astype(o_ref.dtype)


def _gcn_kernel_noproject(a_ref, x_ref, di_ref, b_ref, o_ref, acc_ref):
    # Project-first path: features were already projected (x @ W^T) in the glue,
    # so the finalize step is just the dest-side scaling + bias (no MXU matmul).
    k = pl.program_id(1)

    @pl.when(k == 0)
    def _init():
        acc_ref[...] = jnp.zeros_like(acc_ref)

    acc_ref[...] += jnp.dot(a_ref[...].astype(jnp.bfloat16), x_ref[...],
                            preferred_element_type=jnp.float32)

    @pl.when(k == pl.num_programs(1) - 1)
    def _finalize():
        o_ref[...] = (acc_ref[...] * di_ref[...] + b_ref[...]).astype(o_ref.dtype)


# ---------------------------------------------------------------------------
# Tiling helpers
# ---------------------------------------------------------------------------
def _round_up(v, m):
    return (v + m - 1) // m * m


def _resident_bytes(tm, tk, f_pad, fout_pad, project_in_kernel):
    """Approximate VMEM resident set (double-buffered inputs/outputs + scratch)."""
    r = 2 * tm * tk * 1                 # A tiles, int8, double-buffered
    r += 2 * tk * f_pad * 2             # feature tiles, bf16, double-buffered
    r += 2 * tm * fout_pad * 4          # output tiles, f32, double-buffered
    r += tm * f_pad * 4                 # f32 accumulator scratch
    r += 2 * tm * 1 * 4                 # dest-side deg^{-1/2}
    r += 2 * 1 * fout_pad * 4           # bias
    if project_in_kernel:
        r += 2 * f_pad * fout_pad * 2   # W (bf16)
    return r


def _pick_tiles(n_pad, f_pad, fout_pad, project_in_kernel,
                budget=28 * 1024 * 1024):
    """Largest (tm, tk) dividing n_pad whose resident set fits the VMEM budget.

    Asymmetric by design: big row tiles (tm) cut per-step overhead and feature
    re-reads; the reduction tile (tk) is capped at 1024 (per review).
    """
    tm_cands = (2048, 1024, 512, 256, 128)
    tk_cands = (1024, 512, 256, 128)
    for tm in tm_cands:
        if n_pad % tm:
            continue
        for tk in tk_cands:
            if n_pad % tk or tk > tm:
                continue
            r = _resident_bytes(tm, tk, f_pad, fout_pad, project_in_kernel)
            if r <= budget:
                return tm, tk, r
    tm = tk = 128
    return tm, tk, _resident_bytes(tm, tk, f_pad, fout_pad, project_in_kernel)


# ---------------------------------------------------------------------------
# Forward
# ---------------------------------------------------------------------------
def build_gcn_forward(x, edge_index, weight, bias):
    """x: (N, Fin) f32; edge_index: (2, E) int32; weight: (Fout, Fin); bias: (Fout,)."""
    N, Fin = x.shape
    Fout = weight.shape[0]

    # ---- glue (plain JAX): self loops, degree ----
    self_loops = jnp.arange(N, dtype=edge_index.dtype)
    row = jnp.concatenate([edge_index[0], self_loops])
    col = jnp.concatenate([edge_index[1], self_loops])

    # degree of col (= edge_index_with_self_loops[1]); self-loops guarantee deg >= 1,
    # so the module's inf->0 fixup can never trigger.
    deg = jnp.zeros((N,), jnp.float32).at[col].add(1.0)
    deg_inv_sqrt = jax.lax.rsqrt(deg)

    # ---- padded sizes (lane-dense layout) ----
    N_pad = _round_up(N, 128)
    Fout_pad = _round_up(Fout, 128)

    # Matmul-order selection: run the O(N^2) aggregation over min(Fin, Fout) features.
    project_in_kernel = Fin <= Fout
    if project_in_kernel:
        # aggregate-first: kernel computes (d * (A @ (d*x))) @ W^T + b
        F_pad = _round_up(Fin, 128)
        feats_n = x * deg_inv_sqrt[:, None]          # fold source-side d in f32
        w_pad = (jnp.zeros((F_pad, Fout_pad), jnp.float32)
                 .at[:Fin, :Fout].set(weight.T).astype(jnp.bfloat16))
    else:
        # project-first: h = (d*x) @ W^T as f32 glue; kernel just aggregates + bias.
        F_pad = Fout_pad
        feats_n = jnp.dot(x * deg_inv_sqrt[:, None], weight.T,
                          precision=jax.lax.Precision.HIGHEST)
        w_pad = None

    tm, tk, resident = _pick_tiles(N_pad, F_pad, Fout_pad, project_in_kernel)

    # Dense A_hat at padded size (duplicate edges summed, like SparseTensor.to_dense()),
    # stored as int8 in HBM and upcast to bf16 inside the kernel.
    # Assumption: per-(row,col) edge multiplicity (incl. the self loop) <= 127.
    # TODO(synk): cache A_hat across calls for static graphs; use a CSR/edge-list
    # kernel for genuinely sparse graphs instead of this O(N^2) dense path.
    a_hat = (jnp.zeros((N_pad, N_pad), jnp.int32)
             .at[row, col].add(1)).astype(jnp.int8)

    feats = (jnp.zeros((N_pad, F_pad), jnp.float32)
             .at[:N, :feats_n.shape[1]].set(feats_n).astype(jnp.bfloat16))
    d_pad = jnp.zeros((N_pad, 1), jnp.float32).at[:N, 0].set(deg_inv_sqrt)
    b_pad = jnp.zeros((1, Fout_pad), jnp.float32).at[0, :Fout].set(bias)

    grid = (N_pad // tm, N_pad // tk)      # (row tiles, reduction tiles) — reduction last
    n_row_tiles = grid[0]

    flops = 2 * N_pad * N_pad * F_pad
    if project_in_kernel:
        flops += 2 * N_pad * F_pad * Fout_pad
    bytes_accessed = (N_pad * N_pad * 1                       # A_hat (int8), read once
                      + n_row_tiles * N_pad * F_pad * 2       # feats re-read per row tile
                      + N_pad * Fout_pad * 4                  # output writeback
                      + N_pad * 4 + Fout_pad * 4)             # d, bias
    if project_in_kernel:
        bytes_accessed += F_pad * Fout_pad * 2                # W (bf16)

    vmem_limit = int(min(max(resident + (8 << 20), 32 << 20), 56 << 20))

    in_specs = [
        pl.BlockSpec((tm, tk), lambda i, k: (i, k)),          # A_hat tile
        # TODO(synk): sweep pipeline_mode=pl.Buffered(3) on the A spec on v5e/v6e
        # (extra buffer hides DMA jitter; re-check against the v7x VMEM budget).
        pl.BlockSpec((tk, F_pad), lambda i, k: (k, 0)),       # pre-scaled feature tile
        pl.BlockSpec((tm, 1), lambda i, k: (i, 0)),           # dest-side deg^{-1/2}
    ]
    operands = [a_hat, feats, d_pad]
    if project_in_kernel:
        in_specs.append(pl.BlockSpec((F_pad, Fout_pad), lambda i, k: (0, 0)))  # W^T (bf16)
        operands.append(w_pad)
        kernel = _gcn_kernel_project
    else:
        kernel = _gcn_kernel_noproject
    in_specs.append(pl.BlockSpec((1, Fout_pad), lambda i, k: (0, 0)))          # bias
    operands.append(b_pad)

    out_pad = pl.pallas_call(
        kernel,
        out_shape=jax.ShapeDtypeStruct((N_pad, Fout_pad), x.dtype),
        grid_spec=pltpu.PrefetchScalarGridSpec(
            num_scalar_prefetch=0,
            grid=grid,
            in_specs=in_specs,
            out_specs=pl.BlockSpec((tm, Fout_pad), lambda i, k: (i, 0)),
            scratch_shapes=[pltpu.VMEM((tm, F_pad), jnp.float32)],
        ),
        compiler_params=pltpu.CompilerParams(
            dimension_semantics=("parallel", "arbitrary"),
            vmem_limit_bytes=vmem_limit,
        ),
        cost_estimate=pl.CostEstimate(flops=flops, transcendentals=0,
                                      bytes_accessed=bytes_accessed),
    )(*operands)

    return out_pad[:N, :Fout]


# ---------------------------------------------------------------------------
# References
# ---------------------------------------------------------------------------
def _reference_f32(x, edge_index, weight, bias):
    """Pure-JAX f32 reference mirroring the PyTorch forward."""
    N = x.shape[0]
    hp = jax.lax.Precision.HIGHEST
    self_loops = jnp.arange(N, dtype=edge_index.dtype)
    row = jnp.concatenate([edge_index[0], self_loops])
    col = jnp.concatenate([edge_index[1], self_loops])
    deg = jnp.zeros((N,), jnp.float32).at[col].add(1.0)
    dis = jnp.where(deg > 0, jnp.where(deg > 0, deg, 1.0) ** -0.5, 0.0)
    a = jnp.zeros((N, N), jnp.float32).at[row, col].add(1.0)
    step1 = jnp.dot(jnp.dot(jnp.diag(dis), a, precision=hp), jnp.diag(dis), precision=hp)
    h = jnp.dot(step1, x, precision=hp)
    return jnp.dot(h, weight.T, precision=hp) + bias


def _reference_bf16_matched(x, edge_index, weight, bias):
    """Reference mirroring the kernel's numerics (bf16 MXU operands, f32 accumulate)."""
    N, Fin = x.shape
    Fout = weight.shape[0]
    hp = jax.lax.Precision.HIGHEST
    self_loops = jnp.arange(N, dtype=edge_index.dtype)
    row = jnp.concatenate([edge_index[0], self_loops])
    col = jnp.concatenate([edge_index[1], self_loops])
    deg = jnp.zeros((N,), jnp.float32).at[col].add(1.0)
    dis = jax.lax.rsqrt(deg)
    a = jnp.zeros((N, N), jnp.float32).at[row, col].add(1.0)   # int8 counts exact in bf16
    if Fin <= Fout:
        xs = (x * dis[:, None]).astype(jnp.bfloat16).astype(jnp.float32)
        agg = jnp.dot(a, xs, precision=hp) * dis[:, None]
        w = weight.T.astype(jnp.bfloat16).astype(jnp.float32)
        return jnp.dot(agg.astype(jnp.bfloat16).astype(jnp.float32), w,
                       precision=hp) + bias
    else:
        h = jnp.dot(x * dis[:, None], weight.T, precision=hp)
        hs = h.astype(jnp.bfloat16).astype(jnp.float32)
        return jnp.dot(a, hs, precision=hp) * dis[:, None] + bias


if __name__ == "__main__":
    key = jax.random.PRNGKey(0)
    k_x, k_e, k_w, k_b = jax.random.split(key, 4)

    N = 16          # number of nodes
    E = 32          # number of edges
    IN_CH = 8       # in_channels
    OUT_CH = 16     # out_channels

    x = jax.random.normal(k_x, (N, IN_CH), dtype=jnp.float32)
    edge_index = jax.random.randint(k_e, (2, E), 0, N, dtype=jnp.int32)

    # Deterministic Linear params (Kaiming-uniform-like bounds, seeded).
    bound = 1.0 / (IN_CH ** 0.5)
    weight = jax.random.uniform(k_w, (OUT_CH, IN_CH), jnp.float32, -bound, bound)
    bias = jax.random.uniform(k_b, (OUT_CH,), jnp.float32, -bound, bound)

    out = build_gcn_forward(x, edge_index, weight, bias)
    out = jax.block_until_ready(out)
    assert out.shape == (N, OUT_CH)

    # Tight check vs. a reference that mirrors the kernel's bf16 operand rounding.
    ref_matched = _reference_bf16_matched(x, edge_index, weight, bias)
    assert jnp.allclose(out, ref_matched, atol=2e-3, rtol=2e-3)

    # Loose check vs. the full-f32 module semantics (bf16-compute tolerance).
    ref_f32 = _reference_f32(x, edge_index, weight, bias)
    assert jnp.allclose(out, ref_f32, atol=5e-2, rtol=5e-2)

    print("KERNEL_OK")
</pallas_src>

<mosaic_0001>
module attributes {stable_mosaic.version = 11 : i64} {
  func.func @_gcn_kernel_project(%arg0: i32, %arg1: i32, %arg2: memref<128x128xi8, #tpu.memory_space<vmem>>, %arg3: memref<128x128xbf16, #tpu.memory_space<vmem>>, %arg4: memref<128x1xf32, #tpu.memory_space<vmem>>, %arg5: memref<128x128xbf16, #tpu.memory_space<vmem>>, %arg6: memref<1x128xf32, #tpu.memory_space<vmem>>, %arg7: memref<128x128xf32, #tpu.memory_space<vmem>>, %arg8: memref<128x128xf32, #tpu.memory_space<vmem>>) attributes {dimension_semantics = [#tpu.dimension_semantics<parallel>, #tpu.dimension_semantics<arbitrary>], iteration_bounds = array<i64: 1, 1>, scalar_prefetch = 0 : i64, scratch_operands = 1 : i64, tpu.core_type = #tpu.core_type<tc>, window_params = [{transform_indices = @transform_0, window_bounds = array<i64: 128, 128>}, {transform_indices = @transform_1, window_bounds = array<i64: 128, 128>}, {transform_indices = @transform_2, window_bounds = array<i64: 128, 1>}, {pipeline_mode = #tpu.pipeline_mode<synchronous>, transform_indices = @transform_3, window_bounds = array<i64: 128, 128>}, {pipeline_mode = #tpu.pipeline_mode<synchronous>, transform_indices = @transform_4, window_bounds = array<i64: 1, 128>}, {transform_indices = @transform_5, window_bounds = array<i64: 128, 128>}]} {
    %c0_i32 = arith.constant 0 : i32
    %0 = arith.cmpi eq, %arg1, %c0_i32 : i32
    %1 = arith.extui %0 : i1 to i32
    %c0_i32_0 = arith.constant 0 : i32
    %2 = arith.cmpi ne, %1, %c0_i32_0 : i32
    scf.if %2 {
      %cst_10 = arith.constant 0.000000e+00 : f32
      %13 = vector.broadcast %cst_10 : f32 to vector<128x128xf32>
      %c0_11 = arith.constant 0 : index
      %c0_12 = arith.constant 0 : index
      %14 = vector.load %arg8[%c0_11, %c0_12] : memref<128x128xf32, #tpu.memory_space<vmem>>, vector<128x128xf32>
      tpu.vector_store %arg8[%c0_11, %c0_12], %13 {strides = array<i32>} : memref<128x128xf32, #tpu.memory_space<vmem>>, vector<128x128xf32>,
    } else {
    }
    %c0 = arith.constant 0 : index
    %c0_1 = arith.constant 0 : index
    %3 = vector.load %arg8[%c0, %c0_1] : memref<128x128xf32, #tpu.memory_space<vmem>>, vector<128x128xf32>
    %c0_2 = arith.constant 0 : index
    %c0_3 = arith.constant 0 : index
    %4 = vector.load %arg2[%c0_2, %c0_3] : memref<128x128xi8, #tpu.memory_space<vmem>>, vector<128x128xi8>
    %5 = arith.sitofp %4 : vector<128x128xi8> to vector<128x128xbf16>
    %c0_4 = arith.constant 0 : index
    %c0_5 = arith.constant 0 : index
    %6 = vector.load %arg3[%c0_4, %c0_5] : memref<128x128xbf16, #tpu.memory_space<vmem>>, vector<128x128xbf16>
    %cst = arith.constant dense<0.000000e+00> : vector<128x128xf32>
    %7 = tpu.matmul %5, %6, %cst {dimension_numbers = #tpu.dot_dimension_numbers<[1], [0], [0], [1], [0, 0, 1, 1], [], []>} : vector<128x128xbf16>, vector<128x128xbf16>, vector<128x128xf32> -> vector<128x128xf32>
    %8 = arith.addf %3, %7 : vector<128x128xf32>
    %c0_6 = arith.constant 0 : index
    %c0_7 = arith.constant 0 : index
    %9 = vector.load %arg8[%c0_6, %c0_7] : memref<128x128xf32, #tpu.memory_space<vmem>>, vector<128x128xf32>
    tpu.vector_store %arg8[%c0_6, %c0_7], %8 {strides = array<i32>} : memref<128x128xf32, #tpu.memory_space<vmem>>, vector<128x128xf32>,
    %c0_i32_8 = arith.constant 0 : i32
    %10 = arith.cmpi eq, %arg1, %c0_i32_8 : i32
    %11 = arith.extui %10 : i1 to i32
    %c0_i32_9 = arith.constant 0 : i32
    %12 = arith.cmpi ne, %11, %c0_i32_9 : i32
    scf.if %12 {
      %c0_10 = arith.constant 0 : index
      %c0_11 = arith.constant 0 : index
      %13 = vector.load %arg8[%c0_10, %c0_11] : memref<128x128xf32, #tpu.memory_space<vmem>>, vector<128x128xf32>
      %c0_12 = arith.constant 0 : index
      %c0_13 = arith.constant 0 : index
      %14 = vector.load %arg4[%c0_12, %c0_13] : memref<128x1xf32, #tpu.memory_space<vmem>>, vector<128x1xf32>
      %15 = vector.broadcast %14 : vector<128x1xf32> to vector<128x128xf32>
      %16 = arith.mulf %13, %15 : vector<128x128xf32>
      %17 = arith.truncf %16 : vector<128x128xf32> to vector<128x128xbf16>
      %c0_14 = arith.constant 0 : index
      %c0_15 = arith.constant 0 : index
      %18 = vector.load %arg5[%c0_14, %c0_15] : memref<128x128xbf16, #tpu.memory_space<vmem>>, vector<128x128xbf16>
      %cst_16 = arith.constant dense<0.000000e+00> : vector<128x128xf32>
      %19 = tpu.matmul %17, %18, %cst_16 {dimension_numbers = #tpu.dot_dimension_numbers<[1], [0], [0], [1], [0, 0, 1, 1], [], []>} : vector<128x128xbf16>, vector<128x128xbf16>, vector<128x128xf32> -> vector<128x128xf32>
      %c0_17 = arith.constant 0 : index
      %c0_18 = arith.constant 0 : index
      %20 = vector.load %arg6[%c0_17, %c0_18] : memref<1x128xf32, #tpu.memory_space<vmem>>, vector<1x128xf32>
      %21 = vector.broadcast %20 : vector<1x128xf32> to vector<128x128xf32>
      %22 = arith.addf %19, %21 : vector<128x128xf32>
      %c0_19 = arith.constant 0 : index
      %c0_20 = arith.constant 0 : index
      %23 = vector.load %arg7[%c0_19, %c0_20] : memref<128x128xf32, #tpu.memory_space<vmem>>, vector<128x128xf32>
      tpu.vector_store %arg7[%c0_19, %c0_20], %22 {strides = array<i32>} : memref<128x128xf32, #tpu.memory_space<vmem>>, vector<128x128xf32>,
    } else {
    }
    return
  }
  func.func @transform_0(%arg0: i32, %arg1: i32) -> (i32, i32) {
    %c0_i32 = arith.constant 0 : i32
    return %arg0, %arg1 : i32, i32
  }
  func.func @transform_1(%arg0: i32, %arg1: i32) -> (i32, i32) {
    %c0_i32 = arith.constant 0 : i32
    %c0_i32_0 = arith.constant 0 : i32
    return %arg1, %c0_i32 : i32, i32
  }
  func.func @transform_2(%arg0: i32, %arg1: i32) -> (i32, i32) {
    %c0_i32 = arith.constant 0 : i32
    %c0_i32_0 = arith.constant 0 : i32
    return %arg0, %c0_i32 : i32, i32
  }
  func.func @transform_3(%arg0: i32, %arg1: i32) -> (i32, i32) {
    %c0_i32 = arith.constant 0 : i32
    %c0_i32_0 = arith.constant 0 : i32
    %c0_i32_1 = arith.constant 0 : i32
    return %c0_i32, %c0_i32_0 : i32, i32
  }
  func.func @transform_4(%arg0: i32, %arg1: i32) -> (i32, i32) {
    %c0_i32 = arith.constant 0 : i32
    %c0_i32_0 = arith.constant 0 : i32
    %c0_i32_1 = arith.constant 0 : i32
    return %c0_i32, %c0_i32_0 : i32, i32
  }
  func.func @transform_5(%arg0: i32, %arg1: i32) -> (i32, i32) {
    %c0_i32 = arith.constant 0 : i32
    %c0_i32_0 = arith.constant 0 : i32
    return %arg0, %c0_i32 : i32, i32
  }
}

</mosaic_0001>

<llo_original>
// kernel: tpu_custom_call.1
$region0: #{tpu_custom_call.1}
  #allocation0 [shape = 'u32[]', space=smem, size = 0x4, offset = 0x4, fixed_abs, tag = 'smem constant byte address 0x4 - core index']
  #allocation1 [shape = 'u32[144,128]{1,0:T(1,128)}', space=vmem, size = 0x12000, scoped, tag = 'internal scratch']
  #allocation2 [shape = 'f32[128,128]{1,0:T(8,128)}', space=vmem, size = 0x10000, scoped, tag = 'scratch operand']
  %s0 = inlined_call_operand.hbm [shape: s8[128,128], index: 0, kind: input, shape index: {}]
  %s1 = inlined_call_operand.vmem [shape: bf16[128,128], index: 1, kind: input, shape index: {}]
  %s2 = inlined_call_operand.vmem [shape: f32[128,1], index: 2, kind: input, shape index: {}]
  %s3 = inlined_call_operand.vmem [shape: bf16[128,128], index: 3, kind: input, shape index: {}]
  %s4 = inlined_call_operand.vmem [shape: f32[1,128], index: 4, kind: input, shape index: {}]
  %s5 = inlined_call_operand.hbm [shape: f32[128,128], index: 5, kind: output, shape index: {}]
  %s6 = sld [smem:[#allocation0]]
  $region42: #{tpu_custom_call.1} parent=0
    _
  %s8 = ssub.s32 1, %s6
  %s9 = scalar_select 0, %s8, %s6
  $region1: #{tpu_custom_call.1} parent=0
    #allocation3 [shape = 'u8[16384]{0}', space=vmem, size = 0x4000, scoped, tag = 'input window, operand 0, single buffered']
    #allocation4 [shape = 's32[1]{0}', space=sflag, size = 0x4, scoped, tag = 'scoped memory for tpu_custom_call.1']
    #allocation5 [shape = 's32[1]{0}', space=sflag, size = 0x4, scoped, tag = 'scoped memory for tpu_custom_call.1']
    #allocation6 [shape = 'u8[65536]{0}', space=vmem, size = 0x10000, scoped, tag = 'output window, operand 0, single buffered']
    %10 = vsyncpa [#allocation4], 0
    %11 = vsyncpa [#allocation5], 0
    // Predicated region
    $region2: #{tpu_custom_call.1} parent=1 // pred_check
      _
    $region3: #{tpu_custom_call.1} parent=1 // pred_check_branch
      %13 = sbr.rel (0) target = $region5
    $region4: #{tpu_custom_call.1} parent=1 // pred_region
      %s15 = ssub.s32 512, 512
      %16 = vsyncadd [#allocation4], %s15
      %s17 = sshll.u32 [#allocation3], 4
      %s18 = int_to_ptr.vmem [resolvable:$true] %s17
      %23 = dma.hbm_to_vmem [thread:$0]  %s0, 512, %s18, [#allocation4], 128, 128, 8
    $region5: #{tpu_custom_call.1} parent=1 // pred_fallthru
      _
    // Predicated region
    $region6: #{tpu_custom_call.1} parent=1 // pred_check
      _
    $region7: #{tpu_custom_call.1} parent=1 // pred_check_branch
      %25 = sbr.rel (0) target = $region9
    $region8: #{tpu_custom_call.1} parent=1 // pred_region
      _
    $region9: #{tpu_custom_call.1} parent=1 // pred_fallthru
      _
    // Predicated region
    $region10: #{tpu_custom_call.1} parent=1 // pred_check
      _
    $region11: #{tpu_custom_call.1} parent=1 // pred_check_branch
      %27 = sbr.rel (0) target = $region13
    $region12: #{tpu_custom_call.1} parent=1 // pred_region
      _
    $region13: #{tpu_custom_call.1} parent=1 // pred_fallthru
      _
    // Predicated region
    $region14: #{tpu_custom_call.1} parent=1 // pred_check
      _
    $region15: #{tpu_custom_call.1} parent=1 // pred_check_branch
      %29 = sbr.rel (0) target = $region17
    $region16: #{tpu_custom_call.1} parent=1 // pred_region
      _
    $region17: #{tpu_custom_call.1} parent=1 // pred_fallthru
      _
    // Predicated region
    $region18: #{tpu_custom_call.1} parent=1 // pred_check
      _
    $region19: #{tpu_custom_call.1} parent=1 // pred_check_branch
      %31 = sbr.rel (0) target = $region21
    $region20: #{tpu_custom_call.1} parent=1 // pred_region
      _
    $region21: #{tpu_custom_call.1} parent=1 // pred_fallthru
      _
    // Predicated region
    $region22: #{tpu_custom_call.1} parent=1 // pred_check
      _
    $region23: #{tpu_custom_call.1} parent=1 // pred_check_branch
      %33 = sbr.rel (0) target = $region25
    $region24: #{tpu_custom_call.1} parent=1 // pred_region
      %34 = dma.done [#allocation4], 512
    $region25: #{tpu_custom_call.1} parent=1 // pred_fallthru
      _
    %p36 = scmp.eq.s32.totalorder 0, 0
    // Predicated region
    $region26: #{tpu_custom_call.1} parent=1 // pred_check
      %p37 = pneg %p36
    $region27: #{tpu_custom_call.1} parent=1 // pred_check_branch
      %39 = sbr.rel (%p37) target = $region29
    $region28: #{tpu_custom_call.1} parent=1 // pred_region
      %40 = vst [vmem:[#allocation2] sm:$0xff] 0.0
      %41 = vst [vmem:[#allocation2 + $0x8] sm:$0xff] 0.0
      %42 = vst [vmem:[#allocation2 + $0x10] sm:$0xff] 0.0
      %43 = vst [vmem:[#allocation2 + $0x18] sm:$0xff] 0.0
      %44 = vst [vmem:[#allocation2 + $0x20] sm:$0xff] 0.0
      %45 = vst [vmem:[#allocation2 + $0x28] sm:$0xff] 0.0
      %46 = vst [vmem:[#allocation2 + $0x30] sm:$0xff] 0.0
      %47 = vst [vmem:[#allocation2 + $0x38] sm:$0xff] 0.0
      %48 = vst [vmem:[#allocation2 + $0x40] sm:$0xff] 0.0
      %49 = vst [vmem:[#allocation2 + $0x48] sm:$0xff] 0.0
      %50 = vst [vmem:[#allocation2 + $0x50] sm:$0xff] 0.0
      %51 = vst [vmem:[#allocation2 + $0x58] sm:$0xff] 0.0
      %52 = vst [vmem:[#allocation2 + $0x60] sm:$0xff] 0.0
      %53 = vst [vmem:[#allocation2 + $0x68] sm:$0xff] 0.0
      %54 = vst [vmem:[#allocation2 + $0x70] sm:$0xff] 0.0
      %55 = vst [vmem:[#allocation2 + $0x78] sm:$0xff] 0.0
    $region29: #{tpu_custom_call.1} parent=1 // pred_fallthru
      _
    %v56 = vld [vmem:[#allocation2] sm:$0xff]
    %v57 = vld [vmem:[#allocation2 + $0x8] sm:$0xff]
    %v58 = vld [vmem:[#allocation2 + $0x10] sm:$0xff]
    %v59 = vld [vmem:[#allocation2 + $0x18] sm:$0xff]
    %v60 = vld [vmem:[#allocation2 + $0x20] sm:$0xff]
    %v61 = vld [vmem:[#allocation2 + $0x28] sm:$0xff]
    %v62 = vld [vmem:[#allocation2 + $0x30] sm:$0xff]
    %v63 = vld [vmem:[#allocation2 + $0x38] sm:$0xff]
    %v64 = vld [vmem:[#allocation2 + $0x40] sm:$0xff]
    %v65 = vld [vmem:[#allocation2 + $0x48] sm:$0xff]
    %v66 = vld [vmem:[#allocation2 + $0x50] sm:$0xff]
    %v67 = vld [vmem:[#allocation2 + $0x58] sm:$0xff]
    %v68 = vld [vmem:[#allocation2 + $0x60] sm:$0xff]
    %v69 = vld [vmem:[#allocation2 + $0x68] sm:$0xff]
    %v70 = vld [vmem:[#allocation2 + $0x70] sm:$0xff]
    %v71 = vld [vmem:[#allocation2 + $0x78] sm:$0xff]
    %v72 = vld [vmem:[#allocation3] sm:$0xff]
    %v73 = vld [vmem:[#allocation3 + $0x8] sm:$0xff]
    %v74 = vld [vmem:[#allocation3 + $0x10] sm:$0xff]
    %v75 = vld [vmem:[#allocation3 + $0x18] sm:$0xff]
    %v76 = vunpack.c.l.s8.bf16 %v72
    %v77 = vunpack.c.h.s8.bf16 %v72
    %v78 = vunpack.c.l.s8.bf16 %v73
    %v79 = vunpack.c.h.s8.bf16 %v73
    %v80 = vunpack.c.l.s8.bf16 %v74
    %v81 = vunpack.c.h.s8.bf16 %v74
    %v82 = vunpack.c.l.s8.bf16 %v75
    %v83 = vunpack.c.h.s8.bf16 %v75
    %v84 = vld [vmem:[%s1] sm:$0xf]
    %v85 = vld [vmem:[%s1 + $0x4] sm:$0xf]
    %v86 = vld [vmem:[%s1 + $0x8] sm:$0xf]
    %v87 = vld [vmem:[%s1 + $0xc] sm:$0xf]
    %v88 = vld [vmem:[%s1 + $0x10] sm:$0xf]
    %v89 = vld [vmem:[%s1 + $0x14] sm:$0xf]
    %v90 = vld [vmem:[%s1 + $0x18] sm:$0xf]
    %v91 = vld [vmem:[%s1 + $0x1c] sm:$0xf]
    %v92 = vld [vmem:[%s1 + $0x20] sm:$0xf]
    %v93 = vld [vmem:[%s1 + $0x24] sm:$0xf]
    %v94 = vld [vmem:[%s1 + $0x28] sm:$0xf]
    %v95 = vld [vmem:[%s1 + $0x2c] sm:$0xf]
    %v96 = vld [vmem:[%s1 + $0x30] sm:$0xf]
    %v97 = vld [vmem:[%s1 + $0x34] sm:$0xf]
    %v98 = vld [vmem:[%s1 + $0x38] sm:$0xf]
    %v99 = vld [vmem:[%s1 + $0x3c] sm:$0xf]
    %v116 = vunpack.c.l.b16 %v84
    %v117 = vunpack.c.l.b16 %v85
    %v118 = vunpack.c.l.b16 %v86
    %v119 = vunpack.c.l.b16 %v87
    %v120 = vunpack.c.l.b16 %v88
    %v121 = vunpack.c.l.b16 %v89
    %v122 = vunpack.c.l.b16 %v90
    %v123 = vunpack.c.l.b16 %v91
    %v124 = vunpack.c.l.b16 %v92
    %v125 = vunpack.c.l.b16 %v93
    %v126 = vunpack.c.l.b16 %v94
    %v127 = vunpack.c.l.b16 %v95
    %v128 = vunpack.c.l.b16 %v96
    %v129 = vunpack.c.l.b16 %v97
    %v130 = vunpack.c.l.b16 %v98
    %v131 = vunpack.c.l.b16 %v99
    %v132 = vpack.c.b16 %v117, %v116
    %v133 = vpack.c.b16 %v119, %v118
    %v134 = vpack.c.b16 %v121, %v120
    %v135 = vpack.c.b16 %v123, %v122
    %v136 = vpack.c.b16 %v125, %v124
    %v137 = vpack.c.b16 %v127, %v126
    %v138 = vpack.c.b16 %v129, %v128
    %v139 = vpack.c.b16 %v131, %v130
    %148 = vmatprep.subr.bf16.mxu0 0
    %149 = vmatpush1.bf16.msra.mxu0 %v132
    %150 = vmatprep.subr.bf16.mxu0 0
    %151 = vmatpush1.bf16.msra.mxu0 %v133
    %152 = vmatprep.subr.bf16.mxu0 0
    %153 = vmatpush1.bf16.msra.mxu0 %v134
    %154 = vmatprep.subr.bf16.mxu0 0
    %155 = vmatpush1.bf16.msra.mxu0 %v135
    %156 = vmatprep.subr.bf16.mxu0 0
    %157 = vmatpush1.bf16.msra.mxu0 %v136
    %158 = vmatprep.subr.bf16.mxu0 0
    %159 = vmatpush1.bf16.msra.mxu0 %v137
    %160 = vmatprep.subr.bf16.mxu0 0
    %161 = vmatpush1.bf16.msra.mxu0 %v138
    %162 = vmatprep.subr.bf16.mxu0 0
    %163 = vmatpush1.bf16.msra.mxu0 %v139
    %164 = vmatprep.subr.bf16.mxu0 0
    %165 = vmatpush1.bf16.msra.mxu0 0
    %166 = vmatprep.subr.bf16.mxu0 0
    %167 = vmatpush1.bf16.msra.mxu0 0
    %168 = vmatprep.subr.bf16.mxu0 0
    %169 = vmatpush1.bf16.msra.mxu0 0
    %170 = vmatprep.subr.bf16.mxu0 0
    %171 = vmatpush1.bf16.msra.mxu0 0
    %172 = vmatprep.subr.bf16.mxu0 0
    %173 = vmatpush1.bf16.msra.mxu0 0
    %174 = vmatprep.subr.bf16.mxu0 0
    %175 = vmatpush1.bf16.msra.mxu0 0
    %176 = vmatprep.subr.bf16.mxu0 0
    %177 = vmatpush1.bf16.msra.mxu0 0
    %178 = vmatprep.subr.bf16.mxu0 0
    %179 = vmatpush1.bf16.msra.mxu0 0
    %180 = vmatprep.mubr.bf16.mxu0 0
    %181 = vmatmul.mubr.bf16.gmra.mrb[0].mxu0 %v76
    %v182 = vpop.f32.mrb[0].mxu0
    %v183 = vadd.f32 0.0, %v182
    %v184 = vpop.f32.mrb[0].mxu0
    %v185 = vpop.f32.mrb[0].mxu0
    %v186 = vadd.f32 0.0, %v185
    %v187 = vpop.f32.mrb[0].mxu0
    %188 = vmatprep.mubr.bf16.mxu0 0
    %189 = vmatmul.mubr.bf16.gmra.mrb[0].mxu0 %v77
    %v190 = vpop.f32.mrb[0].mxu0
    %v191 = vadd.f32 0.0, %v190
    %v192 = vpop.f32.mrb[0].mxu0
    %v193 = vpop.f32.mrb[0].mxu0
    %v194 = vadd.f32 0.0, %v193
    %v195 = vpop.f32.mrb[0].mxu0
    %196 = vmatprep.mubr.bf16.mxu0 0
    %197 = vmatmul.mubr.bf16.gmra.mrb[0].mxu0 %v78
    %v198 = vpop.f32.mrb[0].mxu0
    %v199 = vadd.f32 0.0, %v198
    %v200 = vpop.f32.mrb[0].mxu0
    %v201 = vpop.f32.mrb[0].mxu0
    %v202 = vadd.f32 0.0, %v201
    %v203 = vpop.f32.mrb[0].mxu0
    %204 = vmatprep.mubr.bf16.mxu0 0
    %205 = vmatmul.mubr.bf16.gmra.mrb[0].mxu0 %v79
    %v206 = vpop.f32.mrb[0].mxu0
    %v207 = vadd.f32 0.0, %v206
    %v208 = vpop.f32.mrb[0].mxu0
    %v209 = vpop.f32.mrb[0].mxu0
    %v210 = vadd.f32 0.0, %v209
    %v211 = vpop.f32.mrb[0].mxu0
    %212 = vmatprep.mubr.bf16.mxu0 0
    %213 = vmatmul.mubr.bf16.gmra.mrb[0].mxu0 %v80
    %v214 = vpop.f32.mrb[0].mxu0
    %v215 = vadd.f32 0.0, %v214
    %v216 = vpop.f32.mrb[0].mxu0
    %v217 = vpop.f32.mrb[0].mxu0
    %v218 = vadd.f32 0.0, %v217
    %v219 = vpop.f32.mrb[0].mxu0
    %220 = vmatprep.mubr.bf16.mxu0 0
    %221 = vmatmul.mubr.bf16.gmra.mrb[0].mxu0 %v81
    %v222 = vpop.f32.mrb[0].mxu0
    %v223 = vadd.f32 0.0, %v222
    %v224 = vpop.f32.mrb[0].mxu0
    %v225 = vpop.f32.mrb[0].mxu0
    %v226 = vadd.f32 0.0, %v225
    %v227 = vpop.f32.mrb[0].mxu0
    %228 = vmatprep.mubr.bf16.mxu0 0
    %229 = vmatmul.mubr.bf16.gmra.mrb[0].mxu0 %v82
    %v230 = vpop.f32.mrb[0].mxu0
    %v231 = vadd.f32 0.0, %v230
    %v232 = vpop.f32.mrb[0].mxu0
    %v233 = vpop.f32.mrb[0].mxu0
    %v234 = vadd.f32 0.0, %v233
    %v235 = vpop.f32.mrb[0].mxu0
    %236 = vmatprep.mubr.bf16.mxu0 0
    %237 = vmatmul.mubr.bf16.gmra.mrb[0].mxu0 %v83
    %v238 = vpop.f32.mrb[0].mxu0
    %v239 = vadd.f32 0.0, %v238
    %v240 = vpop.f32.mrb[0].mxu0
    %v241 = vpop.f32.mrb[0].mxu0
    %v242 = vadd.f32 0.0, %v241
    %v243 = vpop.f32.mrb[0].mxu0
    %244 = vdwg.mxu0
    %v245 = vadd.f32 %v56, %v183
    %v246 = vadd.f32 %v57, %v186
    %v247 = vadd.f32 %v58, %v191
    %v248 = vadd.f32 %v59, %v194
    %v249 = vadd.f32 %v60, %v199
    %v250 = vadd.f32 %v61, %v202
    %v251 = vadd.f32 %v62, %v207
    %v252 = vadd.f32 %v63, %v210
    %v253 = vadd.f32 %v64, %v215
    %v254 = vadd.f32 %v65, %v218
    %v255 = vadd.f32 %v66, %v223
    %v256 = vadd.f32 %v67, %v226
    %v257 = vadd.f32 %v68, %v231
    %v258 = vadd.f32 %v69, %v234
    %v259 = vadd.f32 %v70, %v239
    %v260 = vadd.f32 %v71, %v242
    %261 = vst [vmem:[#allocation2] sm:$0xff] %v245
    %262 = vst [vmem:[#allocation2 + $0x8] sm:$0xff] %v246
    %263 = vst [vmem:[#allocation2 + $0x10] sm:$0xff] %v247
    %264 = vst [vmem:[#allocation2 + $0x18] sm:$0xff] %v248
    %265 = vst [vmem:[#allocation2 + $0x20] sm:$0xff] %v249
    %266 = vst [vmem:[#allocation2 + $0x28] sm:$0xff] %v250
    %267 = vst [vmem:[#allocation2 + $0x30] sm:$0xff] %v251
    %268 = vst [vmem:[#allocation2 + $0x38] sm:$0xff] %v252
    %269 = vst [vmem:[#allocation2 + $0x40] sm:$0xff] %v253
    %270 = vst [vmem:[#allocation2 + $0x48] sm:$0xff] %v254
    %271 = vst [vmem:[#allocation2 + $0x50] sm:$0xff] %v255
    %272 = vst [vmem:[#allocation2 + $0x58] sm:$0xff] %v256
    %273 = vst [vmem:[#allocation2 + $0x60] sm:$0xff] %v257
    %274 = vst [vmem:[#allocation2 + $0x68] sm:$0xff] %v258
    %275 = vst [vmem:[#allocation2 + $0x70] sm:$0xff] %v259
    %276 = vst [vmem:[#allocation2 + $0x78] sm:$0xff] %v260
    // Predicated region
    $region30: #{tpu_custom_call.1} parent=1 // pred_check
      %p277 = pneg %p36
    $region31: #{tpu_custom_call.1} parent=1 // pred_check_branch
      %279 = sbr.rel (%p277) target = $region33
    $region32: #{tpu_custom_call.1} parent=1 // pred_region
      %v280 = vld [vmem:[#allocation2] sm:$0xff]
      %v281 = vld [vmem:[#allocation2 + $0x8] sm:$0xff]
      %v282 = vld [vmem:[#allocation2 + $0x10] sm:$0xff]
      %v283 = vld [vmem:[#allocation2 + $0x18] sm:$0xff]
      %v284 = vld [vmem:[#allocation2 + $0x20] sm:$0xff]
      %v285 = vld [vmem:[#allocation2 + $0x28] sm:$0xff]
      %v286 = vld [vmem:[#allocation2 + $0x30] sm:$0xff]
      %v287 = vld [vmem:[#allocation2 + $0x38] sm:$0xff]
      %v288 = vld [vmem:[#allocation2 + $0x40] sm:$0xff]
      %v289 = vld [vmem:[#allocation2 + $0x48] sm:$0xff]
      %v290 = vld [vmem:[#allocation2 + $0x50] sm:$0xff]
      %v291 = vld [vmem:[#allocation2 + $0x58] sm:$0xff]
      %v292 = vld [vmem:[#allocation2 + $0x60] sm:$0xff]
      %v293 = vld [vmem:[#allocation2 + $0x68] sm:$0xff]
      %v294 = vld [vmem:[#allocation2 + $0x70] sm:$0xff]
      %v295 = vld [vmem:[#allocation2 + $0x78] sm:$0xff]
      %v296 = vld [vmem:[%s2] sm:$0xff]
      %v297 = vld [vmem:[%s2 + $0x8] sm:$0xff]
      %v298 = vld [vmem:[%s2 + $0x10] sm:$0xff]
      %v299 = vld [vmem:[%s2 + $0x18] sm:$0xff]
      %v300 = vld [vmem:[%s2 + $0x20] sm:$0xff]
      %v301 = vld [vmem:[%s2 + $0x28] sm:$0xff]
      %v302 = vld [vmem:[%s2 + $0x30] sm:$0xff]
      %v303 = vld [vmem:[%s2 + $0x38] sm:$0xff]
      %v304 = vld [vmem:[%s2 + $0x40] sm:$0xff]
      %v305 = vld [vmem:[%s2 + $0x48] sm:$0xff]
      %v306 = vld [vmem:[%s2 + $0x50] sm:$0xff]
      %v307 = vld [vmem:[%s2 + $0x58] sm:$0xff]
      %v308 = vld [vmem:[%s2 + $0x60] sm:$0xff]
      %v309 = vld [vmem:[%s2 + $0x68] sm:$0xff]
      %v310 = vld [vmem:[%s2 + $0x70] sm:$0xff]
      %v311 = vld [vmem:[%s2 + $0x78] sm:$0xff]
      %313 = vset.pattern.permute.xlu0 0
      %314 = vperm.xlu0 %313, %v296
      %v315 = vpop.permute.xlu0 %314
      %318 = vset.pattern.permute.xlu0 0
      %319 = vperm.xlu0 %318, %v297
      %v320 = vpop.permute.xlu0 %319
      %323 = vset.pattern.permute.xlu0 0
      %324 = vperm.xlu0 %323, %v298
      %v325 = vpop.permute.xlu0 %324
      %328 = vset.pattern.permute.xlu0 0
      %329 = vperm.xlu0 %328, %v299
      %v330 = vpop.permute.xlu0 %329
      %333 = vset.pattern.permute.xlu0 0
      %334 = vperm.xlu0 %333, %v300
      %v335 = vpop.permute.xlu0 %334
      %338 = vset.pattern.permute.xlu0 0
      %339 = vperm.xlu0 %338, %v301
      %v340 = vpop.permute.xlu0 %339
      %343 = vset.pattern.permute.xlu0 0
      %344 = vperm.xlu0 %343, %v302
      %v345 = vpop.permute.xlu0 %344
      %348 = vset.pattern.permute.xlu0 0
      %349 = vperm.xlu0 %348, %v303
      %v350 = vpop.permute.xlu0 %349
      %353 = vset.pattern.permute.xlu0 0
      %354 = vperm.xlu0 %353, %v304
      %v355 = vpop.permute.xlu0 %354
      %358 = vset.pattern.permute.xlu0 0
      %359 = vperm.xlu0 %358, %v305
      %v360 = vpop.permute.xlu0 %359
      %363 = vset.pattern.permute.xlu0 0
      %364 = vperm.xlu0 %363, %v306
      %v365 = vpop.permute.xlu0 %364
      %368 = vset.pattern.permute.xlu0 0
      %369 = vperm.xlu0 %368, %v307
      %v370 = vpop.permute.xlu0 %369
      %373 = vset.pattern.permute.xlu0 0
      %374 = vperm.xlu0 %373, %v308
      %v375 = vpop.permute.xlu0 %374
      %378 = vset.pattern.permute.xlu0 0
      %379 = vperm.xlu0 %378, %v309
      %v380 = vpop.permute.xlu0 %379
      %383 = vset.pattern.permute.xlu0 0
      %384 = vperm.xlu0 %383, %v310
      %v385 = vpop.permute.xlu0 %384
      %388 = vset.pattern.permute.xlu0 0
      %389 = vperm.xlu0 %388, %v311
      %v390 = vpop.permute.xlu0 %389
      %v392 = vmul.f32 %v280, %v315
      %v393 = vmul.f32 %v281, %v320
      %v394 = vmul.f32 %v282, %v325
      %v395 = vmul.f32 %v283, %v330
      %v396 = vmul.f32 %v284, %v335
      %v397 = vmul.f32 %v285, %v340
      %v398 = vmul.f32 %v286, %v345
      %v399 = vmul.f32 %v287, %v350
      %v400 = vmul.f32 %v288, %v355
      %v401 = vmul.f32 %v289, %v360
      %v402 = vmul.f32 %v290, %v365
      %v403 = vmul.f32 %v291, %v370
      %v404 = vmul.f32 %v292, %v375
      %v405 = vmul.f32 %v293, %v380
      %v406 = vmul.f32 %v294, %v385
      %v407 = vmul.f32 %v295, %v390
      %v408 = vpack.c.bf16 %v393, %v392
      %v409 = vpack.c.bf16 %v395, %v394
      %v410 = vpack.c.bf16 %v397, %v396
      %v411 = vpack.c.bf16 %v399, %v398
      %v412 = vpack.c.bf16 %v401, %v400
      %v413 = vpack.c.bf16 %v403, %v402
      %v414 = vpack.c.bf16 %v405, %v404
      %v415 = vpack.c.bf16 %v407, %v406
      %v416 = vld [vmem:[%s3] sm:$0xf]
      %v417 = vld [vmem:[%s3 + $0x4] sm:$0xf]
      %v418 = vld [vmem:[%s3 + $0x8] sm:$0xf]
      %v419 = vld [vmem:[%s3 + $0xc] sm:$0xf]
      %v420 = vld [vmem:[%s3 + $0x10] sm:$0xf]
      %v421 = vld [vmem:[%s3 + $0x14] sm:$0xf]
      %v422 = vld [vmem:[%s3 + $0x18] sm:$0xf]
      %v423 = vld [vmem:[%s3 + $0x1c] sm:$0xf]
      %v424 = vld [vmem:[%s3 + $0x20] sm:$0xf]
      %v425 = vld [vmem:[%s3 + $0x24] sm:$0xf]
      %v426 = vld [vmem:[%s3 + $0x28] sm:$0xf]
      %v427 = vld [vmem:[%s3 + $0x2c] sm:$0xf]
      %v428 = vld [vmem:[%s3 + $0x30] sm:$0xf]
      %v429 = vld [vmem:[%s3 + $0x34] sm:$0xf]
      %v430 = vld [vmem:[%s3 + $0x38] sm:$0xf]
      %v431 = vld [vmem:[%s3 + $0x3c] sm:$0xf]
      %v432 = vld [vmem:[%s4] sm:$0x1]
      %v434 = vlaneseq
      %v435 = vshrl.u32 %v434, 7
      %v436 = vsub.s32 0, %v435
      %v437 = vrot.slane %v432, %v436
      %v455 = vunpack.c.l.b16 %v416
      %v456 = vunpack.c.l.b16 %v417
      %v457 = vunpack.c.l.b16 %v418
      %v458 = vunpack.c.l.b16 %v419
      %v459 = vunpack.c.l.b16 %v420
      %v460 = vunpack.c.l.b16 %v421
      %v461 = vunpack.c.l.b16 %v422
      %v462 = vunpack.c.l.b16 %v423
      %v463 = vunpack.c.l.b16 %v424
      %v464 = vunpack.c.l.b16 %v425
      %v465 = vunpack.c.l.b16 %v426
      %v466 = vunpack.c.l.b16 %v427
      %v467 = vunpack.c.l.b16 %v428
      %v468 = vunpack.c.l.b16 %v429
      %v469 = vunpack.c.l.b16 %v430
      %v470 = vunpack.c.l.b16 %v431
      %v471 = vpack.c.b16 %v456, %v455
      %v472 = vpack.c.b16 %v458, %v457
      %v473 = vpack.c.b16 %v460, %v459
      %v474 = vpack.c.b16 %v462, %v461
      %v475 = vpack.c.b16 %v464, %v463
      %v476 = vpack.c.b16 %v466, %v465
      %v477 = vpack.c.b16 %v468, %v467
      %v478 = vpack.c.b16 %v470, %v469
      %487 = vmatprep.subr.bf16.mxu0 0
      %488 = vmatpush1.bf16.msra.mxu0 %v471
      %489 = vmatprep.subr.bf16.mxu0 0
      %490 = vmatpush1.bf16.msra.mxu0 %v472
      %491 = vmatprep.subr.bf16.mxu0 0
      %492 = vmatpush1.bf16.msra.mxu0 %v473
      %493 = vmatprep.subr.bf16.mxu0 0
      %494 = vmatpush1.bf16.msra.mxu0 %v474
      %495 = vmatprep.subr.bf16.mxu0 0
      %496 = vmatpush1.bf16.msra.mxu0 %v475
      %497 = vmatprep.subr.bf16.mxu0 0
      %498 = vmatpush1.bf16.msra.mxu0 %v476
      %499 = vmatprep.subr.bf16.mxu0 0
      %500 = vmatpush1.bf16.msra.mxu0 %v477
      %501 = vmatprep.subr.bf16.mxu0 0
      %502 = vmatpush1.bf16.msra.mxu0 %v478
      %503 = vmatprep.subr.bf16.mxu0 0
      %504 = vmatpush1.bf16.msra.mxu0 0
      %505 = vmatprep.subr.bf16.mxu0 0
      %506 = vmatpush1.bf16.msra.mxu0 0
      %507 = vmatprep.subr.bf16.mxu0 0
      %508 = vmatpush1.bf16.msra.mxu0 0
      %509 = vmatprep.subr.bf16.mxu0 0
      %510 = vmatpush1.bf16.msra.mxu0 0
      %511 = vmatprep.subr.bf16.mxu0 0
      %512 = vmatpush1.bf16.msra.mxu0 0
      %513 = vmatprep.subr.bf16.mxu0 0
      %514 = vmatpush1.bf16.msra.mxu0 0
      %515 = vmatprep.subr.bf16.mxu0 0
      %516 = vmatpush1.bf16.msra.mxu0 0
      %517 = vmatprep.subr.bf16.mxu0 0
      %518 = vmatpush1.bf16.msra.mxu0 0
      %519 = vmatprep.mubr.bf16.mxu0 0
      %520 = vmatmul.mubr.bf16.gmra.mrb[0].mxu0 %v408
      %v521 = vpop.f32.mrb[0].mxu0
      %v522 = vadd.f32 %v437, %v521
      %v523 = vpop.f32.mrb[0].mxu0
      %v524 = vpop.f32.mrb[0].mxu0
      %v525 = vadd.f32 %v437, %v524
      %v526 = vpop.f32.mrb[0].mxu0
      %527 = vmatprep.mubr.bf16.mxu0 0
      %528 = vmatmul.mubr.bf16.gmra.mrb[0].mxu0 %v409
      %v529 = vpop.f32.mrb[0].mxu0
      %v530 = vadd.f32 %v437, %v529
      %v531 = vpop.f32.mrb[0].mxu0
      %v532 = vpop.f32.mrb[0].mxu0
      %v533 = vadd.f32 %v437, %v532
      %v534 = vpop.f32.mrb[0].mxu0
      %535 = vmatprep.mubr.bf16.mxu0 0
      %536 = vmatmul.mubr.bf16.gmra.mrb[0].mxu0 %v410
      %v537 = vpop.f32.mrb[0].mxu0
      %v538 = vadd.f32 %v437, %v537
      %v539 = vpop.f32.mrb[0].mxu0
      %v540 = vpop.f32.mrb[0].mxu0
      %v541 = vadd.f32 %v437, %v540
      %v542 = vpop.f32.mrb[0].mxu0
      %543 = vmatprep.mubr.bf16.mxu0 0
      %544 = vmatmul.mubr.bf16.gmra.mrb[0].mxu0 %v411
      %v545 = vpop.f32.mrb[0].mxu0
      %v546 = vadd.f32 %v437, %v545
      %v547 = vpop.f32.mrb[0].mxu0
      %v548 = vpop.f32.mrb[0].mxu0
      %v549 = vadd.f32 %v437, %v548
      %v550 = vpop.f32.mrb[0].mxu0
      %551 = vmatprep.mubr.bf16.mxu0 0
      %552 = vmatmul.mubr.bf16.gmra.mrb[0].mxu0 %v412
      %v553 = vpop.f32.mrb[0].mxu0
      %v554 = vadd.f32 %v437, %v553
      %v555 = vpop.f32.mrb[0].mxu0
      %v556 = vpop.f32.mrb[0].mxu0
      %v557 = vadd.f32 %v437, %v556
      %v558 = vpop.f32.mrb[0].mxu0
      %559 = vmatprep.mubr.bf16.mxu0 0
      %560 = vmatmul.mubr.bf16.gmra.mrb[0].mxu0 %v413
      %v561 = vpop.f32.mrb[0].mxu0
      %v562 = vadd.f32 %v437, %v561
      %v563 = vpop.f32.mrb[0].mxu0
      %v564 = vpop.f32.mrb[0].mxu0
      %v565 = vadd.f32 %v437, %v564
      %v566 = vpop.f32.mrb[0].mxu0
      %567 = vmatprep.mubr.bf16.mxu0 0
      %568 = vmatmul.mubr.bf16.gmra.mrb[0].mxu0 %v414
      %v569 = vpop.f32.mrb[0].mxu0
      %v570 = vadd.f32 %v437, %v569
      %v571 = vpop.f32.mrb[0].mxu0
      %v572 = vpop.f32.mrb[0].mxu0
      %v573 = vadd.f32 %v437, %v572
      %v574 = vpop.f32.mrb[0].mxu0
      %575 = vmatprep.mubr.bf16.mxu0 0
      %576 = vmatmul.mubr.bf16.gmra.mrb[0].mxu0 %v415
      %v577 = vpop.f32.mrb[0].mxu0
      %v578 = vadd.f32 %v437, %v577
      %v579 = vpop.f32.mrb[0].mxu0
      %v580 = vpop.f32.mrb[0].mxu0
      %v581 = vadd.f32 %v437, %v580
      %v582 = vpop.f32.mrb[0].mxu0
      %583 = vdwg.mxu0
      %584 = vst [vmem:[#allocation6] sm:$0xff] %v522
      %585 = vst [vmem:[#allocation6 + $0x8] sm:$0xff] %v525
      %586 = vst [vmem:[#allocation6 + $0x10] sm:$0xff] %v530
      %587 = vst [vmem:[#allocation6 + $0x18] sm:$0xff] %v533
      %588 = vst [vmem:[#allocation6 + $0x20] sm:$0xff] %v538
      %589 = vst [vmem:[#allocation6 + $0x28] sm:$0xff] %v541
      %590 = vst [vmem:[#allocation6 + $0x30] sm:$0xff] %v546
      %591 = vst [vmem:[#allocation6 + $0x38] sm:$0xff] %v549
      %592 = vst [vmem:[#allocation6 + $0x40] sm:$0xff] %v554
      %593 = vst [vmem:[#allocation6 + $0x48] sm:$0xff] %v557
      %594 = vst [vmem:[#allocation6 + $0x50] sm:$0xff] %v562
      %595 = vst [vmem:[#allocation6 + $0x58] sm:$0xff] %v565
      %596 = vst [vmem:[#allocation6 + $0x60] sm:$0xff] %v570
      %597 = vst [vmem:[#allocation6 + $0x68] sm:$0xff] %v573
      %598 = vst [vmem:[#allocation6 + $0x70] sm:$0xff] %v578
      %599 = vst [vmem:[#allocation6 + $0x78] sm:$0xff] %v581
    $region33: #{tpu_custom_call.1} parent=1 // pred_fallthru
      _
    // Predicated region
    $region34: #{tpu_custom_call.1} parent=1 // pred_check
      _
    $region35: #{tpu_custom_call.1} parent=1 // pred_check_branch
      %601 = sbr.rel (0) target = $region37
    $region36: #{tpu_custom_call.1} parent=1 // pred_region
      %s603 = ssub.s32 2048, 2048
      %604 = vsyncadd [#allocation5], %s603
      %s605 = sshll.u32 [#allocation6], 4
      %s606 = int_to_ptr.vmem [resolvable:$true] %s605
      %611 = dma.vmem_to_hbm [thread:$0]  %s606, 2048, %s5, [#allocation5], 128, 128, 8
    $region37: #{tpu_custom_call.1} parent=1 // pred_fallthru
      _
    // Predicated region
    $region38: #{tpu_custom_call.1} parent=1 // pred_check
      _
    $region39: #{tpu_custom_call.1} parent=1 // pred_check_branch
      %613 = sbr.rel (0) target = $region41
    $region40: #{tpu_custom_call.1} parent=1 // pred_region
      %614 = dma.done [#allocation5], 2048
    $region41: #{tpu_custom_call.1} parent=1 // pred_fallthru
      _
    %615 = vsyncpa [#allocation4], 1
    %616 = vsyncpa [#allocation5], 1

</llo_original>
